<compile_context>
chip_gen: v7x
topology: tpu7x:2x2x1
jax: 0.10.0
libtpu: 0.0.40
codegen_flags: <defaults>
</compile_context>

<pallas_src>
import functools

import jax
import jax.numpy as jnp
from jax.experimental import pallas as pl
from jax.experimental.pallas import tpu as pltpu


_LANE = 128                            # TPU lane width
_WIDTHS = (2048, 1024, 512, 256, 128)  # candidate lane-dense slab widths
_BLOCK_BYTES = 2 * 1024 * 1024         # ~2 MiB per tile per buffer


def _round_up(x, m):
    return ((x + m - 1) // m) * m


def _hard_mask_kernel(thr_ref, x_ref, o_ref):
    # thr_ref: (1,) scalar in SMEM; x_ref / o_ref: (block_rows, W) in VMEM.
    thr = thr_ref[0]
    # Strict '>' matches sigmoid(z) > 0.5 exactly (sigmoid(0) = 0.5 is not > 0.5).
    o_ref[...] = (x_ref[...] > thr).astype(o_ref.dtype)


def _pick_width(n):
    """Largest lane-dense width that divides n (no pad), else 128 with pad."""
    for w in _WIDTHS:
        if n % w == 0:
            return w, 0
    w = _LANE
    rows = pl.cdiv(n, w)
    return w, rows * w - n


def _hard_mask(values, threshold):
    """Forward-only hard mask: (values > threshold) in values.dtype."""
    orig_shape = values.shape
    n = values.size
    if n == 0:
        return values

    thr = jnp.asarray(threshold).reshape(-1)[:1]   # (1,) scalar parameter

    flat = values.reshape(-1)
    w, pad = _pick_width(n)
    if pad:
        flat = jnp.pad(flat, (0, pad))
    rows = (n + pad) // w
    x2d = flat.reshape(rows, w)

    # Row tiling: target ~2 MiB per tile; single block if the whole slab fits.
    itemsize = jnp.dtype(values.dtype).itemsize
    max_rows = max(32, _BLOCK_BYTES // (w * itemsize))
    if rows <= max_rows:
        block_rows = rows                       # block == full array dims
    else:
        block_rows = (max_rows // 32) * 32      # multiple of 32 sublanes
    grid = (pl.cdiv(rows, block_rows),)

    out2d = pl.pallas_call(
        _hard_mask_kernel,
        out_shape=jax.ShapeDtypeStruct((rows, w), values.dtype),
        grid=grid,
        in_specs=[
            # learned threshold: scalar in SMEM
            pl.BlockSpec(memory_space=pltpu.MemorySpace.SMEM),
            pl.BlockSpec((block_rows, w), lambda i: (i, 0)),
        ],
        out_specs=pl.BlockSpec((block_rows, w), lambda i: (i, 0)),
        compiler_params=pltpu.CompilerParams(
            dimension_semantics=("parallel",),
        ),
    )(thr, x2d)

    if pad:
        return out2d.reshape(-1)[:n].reshape(orig_shape)
    return out2d.reshape(orig_shape)


# ---- Public API with straight-through-estimator gradient (custom_vjp) ------
# TODO(synk): the .detach() straight-through trick has no in-kernel
# equivalent (pallas_call is not differentiable); the STE gradient is
# supplied here at the JAX level instead.

@functools.partial(jax.custom_vjp, nondiff_argnums=(2,))
def threshold_masker(values, threshold, tau=0.5):
    """Forward value == hard mask (values > threshold); STE gradient."""
    return _hard_mask(values, threshold)


def _tm_fwd(values, threshold, tau):
    return _hard_mask(values, threshold), (values, threshold)


def _tm_bwd(tau, residuals, g):
    # STE: gradient of soft = sigmoid((x - thr)/tau) w.r.t. x and thr.
    values, threshold = residuals
    thr = jnp.asarray(threshold).reshape(-1)[0]
    z = (values - thr) / tau
    s = jax.nn.sigmoid(z)
    ds = s * (1.0 - s) / tau
    d_values = g * ds
    d_threshold = (-jnp.sum(g * ds)).reshape(jnp.shape(threshold))
    return d_values, d_threshold


threshold_masker.defvjp(_tm_fwd, _tm_bwd)


if __name__ == "__main__":
    key = jax.random.PRNGKey(0)
    # e.g. per-token "values" scores: batch=2, seq=8, dim=128
    values = jax.random.normal(key, (2, 8, 128), dtype=jnp.float32)

    # nn.Parameter(torch.empty(1)) -> deterministic init in-script
    threshold = jnp.array([0.1], dtype=jnp.float32)
    tau = 0.5

    out = threshold_masker(values, threshold, tau)
    out = jax.block_until_ready(out)

    # Pure-JAX reference of the PyTorch forward pass
    soft = jax.nn.sigmoid((values - threshold[0]) / tau)
    hard = (soft > 0.5).astype(jnp.float32)
    ref = soft + (hard - soft)  # == hard mask

    assert out.shape == values.shape and out.dtype == values.dtype
    assert jnp.allclose(out, ref, atol=1e-6), "mismatch vs reference"
    print("KERNEL_OK")
</pallas_src>

<mosaic_0001>
module attributes {stable_mosaic.version = 11 : i64} {
  func.func @_hard_mask_kernel(%arg0: i32, %arg1: memref<1xf32, #tpu.memory_space<smem>>, %arg2: memref<1x2048xf32, #tpu.memory_space<vmem>>, %arg3: memref<1x2048xf32, #tpu.memory_space<vmem>>) attributes {dimension_semantics = [#tpu.dimension_semantics<parallel>], iteration_bounds = array<i64: 1>, scalar_prefetch = 0 : i64, scratch_operands = 0 : i64, tpu.core_type = #tpu.core_type<tc>, window_params = [{transform_indices = @transform_0, window_bounds = array<i64: 1>}, {transform_indices = @transform_1, window_bounds = array<i64: 1, 2048>}, {transform_indices = @transform_2, window_bounds = array<i64: 1, 2048>}]} {
    %c0 = arith.constant 0 : index
    %0 = memref.load %arg1[%c0] : memref<1xf32, #tpu.memory_space<smem>>
    %c0_0 = arith.constant 0 : index
    %c0_1 = arith.constant 0 : index
    %1 = vector.load %arg2[%c0_0, %c0_1] : memref<1x2048xf32, #tpu.memory_space<vmem>>, vector<1x2048xf32>
    %2 = vector.broadcast %0 : f32 to vector<1x2048xf32>
    %3 = arith.cmpf ogt, %1, %2 : vector<1x2048xf32>
    %4 = arith.extui %3 : vector<1x2048xi1> to vector<1x2048xi32>
    %5 = arith.sitofp %4 : vector<1x2048xi32> to vector<1x2048xf32>
    %c0_2 = arith.constant 0 : index
    %c0_3 = arith.constant 0 : index
    %6 = vector.load %arg3[%c0_2, %c0_3] : memref<1x2048xf32, #tpu.memory_space<vmem>>, vector<1x2048xf32>
    tpu.vector_store %arg3[%c0_2, %c0_3], %5 {strides = array<i32>} : memref<1x2048xf32, #tpu.memory_space<vmem>>, vector<1x2048xf32>,
    return
  }
  func.func @transform_0(%arg0: i32) -> i32 {
    %c0_i32 = arith.constant 0 : i32
    %c0_i32_0 = arith.constant 0 : i32
    return %c0_i32 : i32
  }
  func.func @transform_1(%arg0: i32) -> (i32, i32) {
    %c0_i32 = arith.constant 0 : i32
    %c0_i32_0 = arith.constant 0 : i32
    return %arg0, %c0_i32 : i32, i32
  }
  func.func @transform_2(%arg0: i32) -> (i32, i32) {
    %c0_i32 = arith.constant 0 : i32
    %c0_i32_0 = arith.constant 0 : i32
    return %arg0, %c0_i32 : i32, i32
  }
}

</mosaic_0001>

<llo_original>
// kernel: tpu_custom_call.1
$region0: #{tpu_custom_call.1}
  #allocation0 [shape = 'u32[]', space=smem, size = 0x4, offset = 0x4, fixed_abs, tag = 'smem constant byte address 0x4 - core index']
  #allocation1 [shape = 'u32[144,128]{1,0:T(1,128)}', space=vmem, size = 0x12000, scoped, tag = 'internal scratch']
  #allocation2 [shape = 'f32[1]{0:T(128)S(6)}', space=smem, size = 0x200, scoped, tag = 'scoped memory for tpu_custom_call.1']
  %s0 = inlined_call_operand.<no memory space> [shape: f32[1], index: 0, kind: input, shape index: {}]
  %s1 = inlined_call_operand.hbm [shape: f32[1,2048], index: 1, kind: input, shape index: {}]
  %s2 = inlined_call_operand.hbm [shape: f32[1,2048], index: 2, kind: output, shape index: {}]
  %s3 = sld [smem:[#allocation0]]
  $region22: #{tpu_custom_call.1} parent=0
    _
  %s5 = ssub.s32 1, %s3
  %s6 = scalar_select 0, %s5, %s3
  %7 = sst [smem:[#allocation2]] %s0
  $region1: #{tpu_custom_call.1} parent=0
    #allocation3 [shape = 'u8[8192]{0}', space=vmem, size = 0x2000, scoped, tag = 'input window, operand 1, single buffered']
    #allocation4 [shape = 's32[1]{0}', space=sflag, size = 0x4, scoped, tag = 'scoped memory for tpu_custom_call.1']
    #allocation5 [shape = 's32[1]{0}', space=sflag, size = 0x4, scoped, tag = 'scoped memory for tpu_custom_call.1']
    #allocation6 [shape = 'u8[8192]{0}', space=vmem, size = 0x2000, scoped, tag = 'output window, operand 0, single buffered']
    %8 = vsyncpa [#allocation4], 0
    %9 = vsyncpa [#allocation5], 0
    // Predicated region
    $region2: #{tpu_custom_call.1} parent=1 // pred_check
      _
    $region3: #{tpu_custom_call.1} parent=1 // pred_check_branch
      %11 = sbr.rel (0) target = $region5
    $region4: #{tpu_custom_call.1} parent=1 // pred_region
      _
    $region5: #{tpu_custom_call.1} parent=1 // pred_fallthru
      _
    // Predicated region
    $region6: #{tpu_custom_call.1} parent=1 // pred_check
      _
    $region7: #{tpu_custom_call.1} parent=1 // pred_check_branch
      %13 = sbr.rel (0) target = $region9
    $region8: #{tpu_custom_call.1} parent=1 // pred_region
      %s15 = ssub.s32 256, 256
      %16 = vsyncadd [#allocation4], %s15
      %s18 = sshll.u32 [#allocation3], 4
      %s19 = int_to_ptr.vmem [resolvable:$true] %s18
      %21 = dma.hbm_to_vmem [thread:$0]  %s1, 256, %s19, [#allocation4]
    $region9: #{tpu_custom_call.1} parent=1 // pred_fallthru
      _
    // Predicated region
    $region10: #{tpu_custom_call.1} parent=1 // pred_check
      _
    $region11: #{tpu_custom_call.1} parent=1 // pred_check_branch
      %23 = sbr.rel (0) target = $region13
    $region12: #{tpu_custom_call.1} parent=1 // pred_region
      %24 = dma.done [#allocation4], 256
    $region13: #{tpu_custom_call.1} parent=1 // pred_fallthru
      _
    %s25 = sld [smem:[#allocation2]]
    %v26 = vld [vmem:[#allocation3] sm:$0xff]
    %v27 = vld [vmem:[#allocation3 + $0x8] sm:$0xff]
    %v28 = vstv %s25
    %vm29 = vcmp.gt.f32.partialorder %v26, %v28
    %vm30 = vcmp.gt.f32.partialorder %v27, %v28
    %v31 = vsel %vm29, 1, 0
    %v32 = vsel %vm30, 1, 0
    %v33 = vcvt.s32.f32 %v31
    %v34 = vcvt.s32.f32 %v32
    %35 = vst [vmem:[#allocation6] sm:$0xff] %v33
    %36 = vst [vmem:[#allocation6 + $0x8] sm:$0xff] %v34
    // Predicated region
    $region14: #{tpu_custom_call.1} parent=1 // pred_check
      _
    $region15: #{tpu_custom_call.1} parent=1 // pred_check_branch
      %38 = sbr.rel (0) target = $region17
    $region16: #{tpu_custom_call.1} parent=1 // pred_region
      %s40 = ssub.s32 256, 256
      %41 = vsyncadd [#allocation5], %s40
      %s43 = sshll.u32 [#allocation6], 4
      %s44 = int_to_ptr.vmem [resolvable:$true] %s43
      %46 = dma.vmem_to_hbm [thread:$0]  %s44, 256, %s2, [#allocation5]
    $region17: #{tpu_custom_call.1} parent=1 // pred_fallthru
      _
    // Predicated region
    $region18: #{tpu_custom_call.1} parent=1 // pred_check
      _
    $region19: #{tpu_custom_call.1} parent=1 // pred_check_branch
      %48 = sbr.rel (0) target = $region21
    $region20: #{tpu_custom_call.1} parent=1 // pred_region
      %49 = dma.done [#allocation5], 256
    $region21: #{tpu_custom_call.1} parent=1 // pred_fallthru
      _
    %50 = vsyncpa [#allocation4], 1
    %51 = vsyncpa [#allocation5], 1

</llo_original>
